<compile_context>
chip_gen: v7x
topology: tpu7x:2x2x1
jax: 0.10.0
libtpu: 0.0.40
codegen_flags: <defaults>
</compile_context>

<pallas_src>
import functools

import jax
import jax.numpy as jnp
from jax import lax
from jax.experimental import pallas as pl
from jax.experimental.pallas import tpu as pltpu


_MIN_TK = 128  # lane width; K-tiles are multiples of this


def _vmem_info():
    """(physical VMEM bytes, conservative per-kernel budget)."""
    phys = 64 * 1024 * 1024  # safe default (v7x per-TC)
    try:
        info = pltpu.get_tpu_info()
        phys = int(getattr(info, "vmem_capacity_bytes", phys))
    except Exception:
        pass
    budget = min(phys // 2, 48 * 1024 * 1024)
    return phys, budget


def _choose_tk(n, m, itemsize, budget):
    """Largest multiple-of-128 K-tile whose double-buffered copy fits the budget."""
    m_pad128 = -(-m // _MIN_TK) * _MIN_TK
    fixed = 4 * n * n * 4 + (1 << 20)          # gram out + target + slack (f32)
    avail = max(budget - fixed, 2 * n * _MIN_TK * itemsize)
    tk = avail // (2 * n * itemsize)           # 2x: double-buffered feature tile
    tk = max(_MIN_TK, (tk // _MIN_TK) * _MIN_TK)
    return min(tk, m_pad128)


def _gram_mse_single_kernel(feat_ref, target_ref, g_ref, loss_ref, *, weight, divisor):
    """Fast path: whole feature matrix in one tile (no init/epilogue branches)."""
    f = feat_ref[...]
    gram = lax.dot_general(
        f, f,
        dimension_numbers=(((1,), (1,)), ((), ())),   # contract last dims: f @ f.T
        preferred_element_type=jnp.float32,
    )
    gram = gram * jnp.float32(weight / divisor)
    g_ref[...] = gram.astype(g_ref.dtype)
    diff = gram - target_ref[...].astype(jnp.float32)
    loss_ref[...] = jnp.mean(diff * diff).reshape(1, 1).astype(loss_ref.dtype)


def _gram_mse_reduce_kernel(feat_ref, target_ref, g_ref, loss_ref, *, weight, divisor):
    """K-reduction path: accumulate directly into the resident gram output block."""
    k = pl.program_id(0)

    @pl.when(k == 0)
    def _():
        g_ref[...] = jnp.zeros_like(g_ref)

    f = feat_ref[...]
    g_ref[...] += lax.dot_general(
        f, f,
        dimension_numbers=(((1,), (1,)), ((), ())),   # contract last dims: f @ f.T
        preferred_element_type=jnp.float32,
    )

    @pl.when(k == pl.num_programs(0) - 1)
    def _():
        gram = g_ref[...] * jnp.float32(weight / divisor)
        g_ref[...] = gram
        diff = gram - target_ref[...].astype(jnp.float32)
        loss_ref[...] = jnp.mean(diff * diff).reshape(1, 1).astype(loss_ref.dtype)


def _weighted_gram_and_mse(feature, target_gram, *, weight, divisor, tk=None):
    """feature (N, M) in its native dtype, target_gram (N, N) -> (G, loss)."""
    N, M = feature.shape
    itemsize = jnp.dtype(feature.dtype).itemsize
    phys, budget = _vmem_info()

    if tk is None:
        tk = _choose_tk(N, M, itemsize, budget)
    tk = max(_MIN_TK, (int(tk) // _MIN_TK) * _MIN_TK)

    # Zero-pad the reduction axis: padded columns contribute 0 to the Gram sum.
    m_pad = pl.cdiv(M, tk) * tk
    if m_pad != M:
        feature = jnp.pad(feature, ((0, 0), (0, m_pad - M)))
    kt = m_pad // tk

    # Raise the scoped VMEM limit to cover the chosen tiles (capped below physical).
    est_vmem = 2 * N * tk * itemsize + 4 * N * N * 4 + (2 << 20)
    vmem_limit = int(min(max(est_vmem, 32 << 20), int(phys * 0.75)))

    kernel_fn = _gram_mse_single_kernel if kt == 1 else _gram_mse_reduce_kernel
    kernel = functools.partial(kernel_fn, weight=float(weight), divisor=float(divisor))

    g, loss = pl.pallas_call(
        kernel,
        out_shape=(
            jax.ShapeDtypeStruct((N, N), jnp.float32),
            jax.ShapeDtypeStruct((1, 1), jnp.float32),
        ),
        grid_spec=pltpu.PrefetchScalarGridSpec(
            num_scalar_prefetch=0,
            grid=(kt,),
            in_specs=[
                pl.BlockSpec((N, tk), lambda k: (0, k)),   # streamed feature K-tile
                pl.BlockSpec((N, N), lambda k: (0, 0)),    # target gram (resident)
            ],
            out_specs=[
                pl.BlockSpec((N, N), lambda k: (0, 0)),    # gram / accumulator
                pl.BlockSpec((1, 1), lambda k: (0, 0)),    # scalar loss
            ],
        ),
        compiler_params=pltpu.CompilerParams(
            dimension_semantics=("arbitrary",),            # reduction axis
            vmem_limit_bytes=vmem_limit,
        ),
    )(feature, target_gram)
    return g, loss[0, 0]


class StyleLossPallas:
    """JAX/Pallas equivalent of the PyTorch StyleLoss module."""

    def __init__(self, weight, target_feat, *, tk=None):
        # target_feat: NCHW feature map of the style target.
        a, b, c, d = target_feat.shape
        self._weight = float(weight)
        self._tk = tk
        feat = jnp.asarray(target_feat).reshape(a * b, c * d)  # native dtype
        # target = gram(target).detach() * weight, computed with the same kernel
        # (the MSE against a zero target is discarded; one-time cost).
        zero_tgt = jnp.zeros((a * b, a * b), jnp.float32)
        g_t, _ = _weighted_gram_and_mse(
            feat, zero_tgt, weight=self._weight, divisor=a * b * c * d, tk=tk)
        self._target = g_t  # already multiplied by weight inside the kernel

    def __call__(self, x):
        a, b, c, d = x.shape
        feature = x.reshape(a * b, c * d)  # keep native dtype (bf16 stays bf16)
        G, loss = _weighted_gram_and_mse(
            feature, self._target, weight=self._weight,
            divisor=a * b * c * d, tk=self._tk)
        self.G = G
        self.loss = loss
        self.output = x  # input.clone(): JAX arrays are immutable, identity suffices
        return self.output


if __name__ == "__main__":
    key = jax.random.PRNGKey(0)
    k_x, k_t = jax.random.split(key)

    # Small NCHW shapes consistent with the module: (a, b, c, d) = (2, 4, 16, 16)
    a, b, c, d = 2, 4, 16, 16
    x = jax.random.normal(k_x, (a, b, c, d), dtype=jnp.float32)
    target_feat = jax.random.normal(k_t, (a, b, c, d), dtype=jnp.float32)
    weight = 1000.0

    module = StyleLossPallas(weight, target_feat)   # auto-sized tk (single-step here)
    out = module(x)
    jax.block_until_ready((out, module.G, module.loss))

    # Pure-JAX reference check.
    def ref_gram(t):
        f = t.reshape(a * b, c * d)
        return (f @ f.T) / (a * b * c * d)

    G_ref = ref_gram(x) * weight
    T_ref = ref_gram(target_feat) * weight
    loss_ref = jnp.mean((G_ref - T_ref) ** 2)

    assert jnp.allclose(out, x)
    assert jnp.allclose(module.G, G_ref, rtol=1e-4, atol=1e-2)
    assert jnp.allclose(module.loss, loss_ref, rtol=1e-4, atol=1e-1)

    # Also exercise the multi-step K-reduction path (forced tk=128 -> 2 grid steps).
    feat = x.reshape(a * b, c * d)
    G2, loss2 = _weighted_gram_and_mse(
        feat, T_ref, weight=weight, divisor=a * b * c * d, tk=128)
    jax.block_until_ready((G2, loss2))
    assert jnp.allclose(G2, G_ref, rtol=1e-4, atol=1e-2)
    assert jnp.allclose(loss2, loss_ref, rtol=1e-4, atol=1e-1)

    print("KERNEL_OK")
</pallas_src>

<mosaic_0001>
module attributes {stable_mosaic.version = 11 : i64} {
  func.func @_gram_mse_single_kernel(%arg0: i32, %arg1: memref<8x256xf32, #tpu.memory_space<vmem>>, %arg2: memref<8x8xf32, #tpu.memory_space<vmem>>, %arg3: memref<8x8xf32, #tpu.memory_space<vmem>>, %arg4: memref<1x1xf32, #tpu.memory_space<vmem>>) attributes {dimension_semantics = [#tpu.dimension_semantics<arbitrary>], iteration_bounds = array<i64: 1>, scalar_prefetch = 0 : i64, scratch_operands = 0 : i64, tpu.core_type = #tpu.core_type<tc>, window_params = [{transform_indices = @transform_0, window_bounds = array<i64: 8, 256>}, {pipeline_mode = #tpu.pipeline_mode<synchronous>, transform_indices = @transform_1, window_bounds = array<i64: 8, 8>}, {pipeline_mode = #tpu.pipeline_mode<synchronous>, transform_indices = @transform_2, window_bounds = array<i64: 8, 8>}, {pipeline_mode = #tpu.pipeline_mode<synchronous>, transform_indices = @transform_3, window_bounds = array<i64: 1, 1>}]} {
    %c0 = arith.constant 0 : index
    %c0_0 = arith.constant 0 : index
    %0 = vector.load %arg1[%c0, %c0_0] : memref<8x256xf32, #tpu.memory_space<vmem>>, vector<8x256xf32>
    %cst = arith.constant dense<0.000000e+00> : vector<8x8xf32>
    %1 = tpu.matmul %0, %0, %cst {dimension_numbers = #tpu.dot_dimension_numbers<[1], [1], [0], [0], [0, 0, 1, 0], [], []>} : vector<8x256xf32>, vector<8x256xf32>, vector<8x8xf32> -> vector<8x8xf32>
    %cst_1 = arith.constant 0.48828125 : f32
    %2 = vector.broadcast %cst_1 : f32 to vector<8x8xf32>
    %3 = arith.mulf %1, %2 : vector<8x8xf32>
    %c0_2 = arith.constant 0 : index
    %c0_3 = arith.constant 0 : index
    %4 = vector.load %arg3[%c0_2, %c0_3] : memref<8x8xf32, #tpu.memory_space<vmem>>, vector<8x8xf32>
    tpu.vector_store %arg3[%c0_2, %c0_3], %3 {strides = array<i32>} : memref<8x8xf32, #tpu.memory_space<vmem>>, vector<8x8xf32>,
    %c0_4 = arith.constant 0 : index
    %c0_5 = arith.constant 0 : index
    %5 = vector.load %arg2[%c0_4, %c0_5] : memref<8x8xf32, #tpu.memory_space<vmem>>, vector<8x8xf32>
    %6 = arith.subf %3, %5 : vector<8x8xf32>
    %7 = arith.mulf %6, %6 : vector<8x8xf32>
    %8 = vector.shape_cast %7 : vector<8x8xf32> to vector<1x8x8xf32>
    %cst_6 = arith.constant dense<0.000000e+00> : vector<1xf32>
    %9 = vector.multi_reduction <add>, %8, %cst_6 [1, 2] : vector<1x8x8xf32> to vector<1xf32>
    %10 = vector.shape_cast %9 : vector<1xf32> to vector<1x1x1xf32>
    %11 = vector.extract %10[0, 0, 0] : f32 from vector<1x1x1xf32>
    %cst_7 = arith.constant 6.400000e+01 : f32
    %12 = arith.divf %11, %cst_7 : f32
    %13 = vector.broadcast %12 : f32 to vector<1x1xf32>
    %c0_8 = arith.constant 0 : index
    %c0_9 = arith.constant 0 : index
    %14 = vector.load %arg4[%c0_8, %c0_9] : memref<1x1xf32, #tpu.memory_space<vmem>>, vector<1x1xf32>
    tpu.vector_store %arg4[%c0_8, %c0_9], %13 {strides = array<i32>} : memref<1x1xf32, #tpu.memory_space<vmem>>, vector<1x1xf32>,
    return
  }
  func.func @transform_0(%arg0: i32) -> (i32, i32) {
    %c0_i32 = arith.constant 0 : i32
    %c0_i32_0 = arith.constant 0 : i32
    return %c0_i32, %arg0 : i32, i32
  }
  func.func @transform_1(%arg0: i32) -> (i32, i32) {
    %c0_i32 = arith.constant 0 : i32
    %c0_i32_0 = arith.constant 0 : i32
    %c0_i32_1 = arith.constant 0 : i32
    return %c0_i32, %c0_i32_0 : i32, i32
  }
  func.func @transform_2(%arg0: i32) -> (i32, i32) {
    %c0_i32 = arith.constant 0 : i32
    %c0_i32_0 = arith.constant 0 : i32
    %c0_i32_1 = arith.constant 0 : i32
    return %c0_i32, %c0_i32_0 : i32, i32
  }
  func.func @transform_3(%arg0: i32) -> (i32, i32) {
    %c0_i32 = arith.constant 0 : i32
    %c0_i32_0 = arith.constant 0 : i32
    %c0_i32_1 = arith.constant 0 : i32
    return %c0_i32, %c0_i32_0 : i32, i32
  }
}

</mosaic_0001>

<llo_original>
// kernel: tpu_custom_call.1
$region0: #{tpu_custom_call.1}
  #allocation0 [shape = 'u32[]', space=smem, size = 0x4, offset = 0x4, fixed_abs, tag = 'smem constant byte address 0x4 - core index']
  #allocation1 [shape = 'u32[144,128]{1,0:T(1,128)}', space=vmem, size = 0x12000, scoped, tag = 'internal scratch']
  %s0 = inlined_call_operand.hbm [shape: f32[8,256], index: 0, kind: input, shape index: {}]
  %s1 = inlined_call_operand.hbm [shape: f32[8,8], index: 1, kind: input, shape index: {}]
  %s2 = inlined_call_operand.hbm [shape: f32[8,8], index: 2, kind: output, shape index: {0}]
  %s3 = inlined_call_operand.hbm [shape: f32[1,1], index: 3, kind: output, shape index: {1}]
  %4 = xla_tuple %s2, %s3
  %s5 = sld [smem:[#allocation0]]
  $region34: #{tpu_custom_call.1} parent=0
    _
  %s7 = ssub.s32 1, %s5
  %s8 = scalar_select 0, %s7, %s5
  $region1: #{tpu_custom_call.1} parent=0
    #allocation2 [shape = 'u8[8192]{0}', space=vmem, size = 0x2000, scoped, tag = 'input window, operand 0, single buffered']
    #allocation3 [shape = 's32[1]{0}', space=sflag, size = 0x4, scoped, tag = 'scoped memory for tpu_custom_call.1']
    #allocation4 [shape = 's32[1]{0}', space=sflag, size = 0x4, scoped, tag = 'scoped memory for tpu_custom_call.1']
    #allocation5 [shape = 'u8[4096]{0}', space=vmem, size = 0x1000, scoped, tag = 'input window, operand 1, single buffered']
    #allocation6 [shape = 's32[1]{0}', space=sflag, size = 0x4, scoped, tag = 'scoped memory for tpu_custom_call.1']
    #allocation7 [shape = 'u8[4096]{0}', space=vmem, size = 0x1000, scoped, tag = 'output window, operand 0, single buffered']
    #allocation8 [shape = 'u8[512]{0}', space=vmem, size = 0x400, scoped, tag = 'output window, operand 1, single buffered']
    #allocation9 [shape = 's32[1]{0}', space=sflag, size = 0x4, scoped, tag = 'scoped memory for tpu_custom_call.1']
    %9 = vsyncpa [#allocation3], 0
    %10 = vsyncpa [#allocation6], 0
    %11 = vsyncpa [#allocation4], 0
    %12 = vsyncpa [#allocation9], 0
    // Predicated region
    $region2: #{tpu_custom_call.1} parent=1 // pred_check
      _
    $region3: #{tpu_custom_call.1} parent=1 // pred_check_branch
      %14 = sbr.rel (0) target = $region5
    $region4: #{tpu_custom_call.1} parent=1 // pred_region
      %s16 = ssub.s32 256, 256
      %17 = vsyncadd [#allocation3], %s16
      %s19 = sshll.u32 [#allocation2], 4
      %s20 = int_to_ptr.vmem [resolvable:$true] %s19
      %22 = dma.hbm_to_vmem [thread:$0]  %s0, 256, %s20, [#allocation3]
    $region5: #{tpu_custom_call.1} parent=1 // pred_fallthru
      _
    // Predicated region
    $region6: #{tpu_custom_call.1} parent=1 // pred_check
      _
    $region7: #{tpu_custom_call.1} parent=1 // pred_check_branch
      %24 = sbr.rel (0) target = $region9
    $region8: #{tpu_custom_call.1} parent=1 // pred_region
      %s26 = ssub.s32 128, 128
      %27 = vsyncadd [#allocation6], %s26
      %s29 = sshll.u32 [#allocation5], 4
      %s30 = int_to_ptr.vmem [resolvable:$true] %s29
      %32 = dma.hbm_to_vmem [thread:$0]  %s1, 128, %s30, [#allocation6]
    $region9: #{tpu_custom_call.1} parent=1 // pred_fallthru
      _
    // Predicated region
    $region10: #{tpu_custom_call.1} parent=1 // pred_check
      _
    $region11: #{tpu_custom_call.1} parent=1 // pred_check_branch
      %34 = sbr.rel (0) target = $region13
    $region12: #{tpu_custom_call.1} parent=1 // pred_region
      %35 = dma.done [#allocation3], 256
    $region13: #{tpu_custom_call.1} parent=1 // pred_fallthru
      _
    // Predicated region
    $region14: #{tpu_custom_call.1} parent=1 // pred_check
      _
    $region15: #{tpu_custom_call.1} parent=1 // pred_check_branch
      %37 = sbr.rel (0) target = $region17
    $region16: #{tpu_custom_call.1} parent=1 // pred_region
      %38 = dma.done [#allocation6], 128
    $region17: #{tpu_custom_call.1} parent=1 // pred_fallthru
      _
    %v39 = vld [vmem:[#allocation2] sm:$0xff]
    %v40 = vld [vmem:[#allocation2 + $0x8] sm:$0xff]
    %41 = vmatprep.subr.mxu0 %v40
    %42 = vmatpush1.xpose.msra.mxu0 %v39
    %43 = vmatprep.subr.mxu0 0.0
    %44 = vmatpush1.xpose.msra.mxu0 0.0
    %45 = vmatprep.subr.mxu0 0.0
    %46 = vmatpush1.xpose.msra.mxu0 0.0
    %47 = vmatprep.subr.mxu0 0.0
    %48 = vmatpush1.xpose.msra.mxu0 0.0
    %49 = vmatprep.subr.mxu0 0.0
    %50 = vmatpush1.xpose.msra.mxu0 0.0
    %51 = vmatprep.subr.mxu0 0.0
    %52 = vmatpush1.xpose.msra.mxu0 0.0
    %53 = vmatprep.subr.mxu0 0.0
    %54 = vmatpush1.xpose.msra.mxu0 0.0
    %55 = vmatprep.subr.mxu0 0.0
    %56 = vmatpush1.xpose.msra.mxu0 0.0
    %57 = vmatprep.subr.mxu0 0.0
    %58 = vmatpush1.xpose.msra.mxu0 0.0
    %59 = vmatprep.subr.mxu0 0.0
    %60 = vmatpush1.xpose.msra.mxu0 0.0
    %61 = vmatprep.subr.mxu0 0.0
    %62 = vmatpush1.xpose.msra.mxu0 0.0
    %63 = vmatprep.subr.mxu0 0.0
    %64 = vmatpush1.xpose.msra.mxu0 0.0
    %65 = vmatprep.subr.mxu0 0.0
    %66 = vmatpush1.xpose.msra.mxu0 0.0
    %67 = vmatprep.subr.mxu0 0.0
    %68 = vmatpush1.xpose.msra.mxu0 0.0
    %69 = vmatprep.subr.mxu0 0.0
    %70 = vmatpush1.xpose.msra.mxu0 0.0
    %71 = vmatprep.subr.mxu0 0.0
    %72 = vmatpush1.xpose.msra.mxu0 0.0
    %73 = vmatprep.subr.mxu0 0.0
    %74 = vmatpush1.xpose.msra.mxu0 0.0
    %75 = vmatprep.subr.mxu0 0.0
    %76 = vmatpush1.xpose.msra.mxu0 0.0
    %77 = vmatprep.subr.mxu0 0.0
    %78 = vmatpush1.xpose.msra.mxu0 0.0
    %79 = vmatprep.subr.mxu0 0.0
    %80 = vmatpush1.xpose.msra.mxu0 0.0
    %81 = vmatprep.subr.mxu0 0.0
    %82 = vmatpush1.xpose.msra.mxu0 0.0
    %83 = vmatprep.subr.mxu0 0.0
    %84 = vmatpush1.xpose.msra.mxu0 0.0
    %85 = vmatprep.subr.mxu0 0.0
    %86 = vmatpush1.xpose.msra.mxu0 0.0
    %87 = vmatprep.subr.mxu0 0.0
    %88 = vmatpush1.xpose.msra.mxu0 0.0
    %89 = vmatprep.subr.mxu0 0.0
    %90 = vmatpush1.xpose.msra.mxu0 0.0
    %91 = vmatprep.subr.mxu0 0.0
    %92 = vmatpush1.xpose.msra.mxu0 0.0
    %93 = vmatprep.subr.mxu0 0.0
    %94 = vmatpush1.xpose.msra.mxu0 0.0
    %95 = vmatprep.subr.mxu0 0.0
    %96 = vmatpush1.xpose.msra.mxu0 0.0
    %97 = vmatprep.subr.mxu0 0.0
    %98 = vmatpush1.xpose.msra.mxu0 0.0
    %99 = vmatprep.subr.mxu0 0.0
    %100 = vmatpush1.xpose.msra.mxu0 0.0
    %101 = vmatprep.subr.mxu0 0.0
    %102 = vmatpush1.xpose.msra.mxu0 0.0
    %103 = vmatprep.subr.mxu0 0.0
    %104 = vmatpush1.xpose.msra.mxu0 0.0
    %105 = vmatprep.mubr.f32.mxu0 %v40
    %106 = vmatmul.mubr.f32.gmra.mrb[0].mxu0 %v39
    %v107 = vpop.f32.mrb[0].mxu0
    %v108 = vadd.f32 0.0, %v107
    %v109 = vpop.f32.mrb[0].mxu0
    %110 = vdwg.mxu0
    %v111 = vmul.f32 %v108, 0.48828125
    %vm112 = vcmask 64512
    %113 = vst.msk [vmem:[#allocation7] sm:$0xff] %vm112, %v111
    %v114 = vld [vmem:[#allocation5] sm:$0xff]
    %v115 = vsub.f32 %v111, %v114
    %v116 = vmul.f32 %v115, %v115
    %v117 = vsel %vm112, %v116, 0.0
    %118 = vadd.xlane.f32.xlu0 %v117
    %v119 = vpop.xlane.xlu0 %118
    %v120 = vrot.slane %v119, 4
    %v121 = vadd.f32 %v119, %v120
    %v122 = vrot.slane %v121, 2
    %v123 = vadd.f32 %v121, %v122
    %v124 = vrot.slane %v123, 1
    %v125 = vadd.f32 %v123, %v124
    %s126 = vtos %v125
    %v127 = vrcp.pop 64.0
    %s128 = vtos %v127
    %s129 = smul.f32 %s126, %s128
    %v130 = vstv %s129
    %vm131 = vcmask 0
    %132 = vst.msk [vmem:[#allocation8] sm:$0x1] %vm131, %v130
    // Predicated region
    $region18: #{tpu_custom_call.1} parent=1 // pred_check
      _
    $region19: #{tpu_custom_call.1} parent=1 // pred_check_branch
      %134 = sbr.rel (0) target = $region21
    $region20: #{tpu_custom_call.1} parent=1 // pred_region
      %s136 = ssub.s32 128, 128
      %137 = vsyncadd [#allocation4], %s136
      %s139 = sshll.u32 [#allocation7], 4
      %s140 = int_to_ptr.vmem [resolvable:$true] %s139
      %142 = dma.vmem_to_hbm [thread:$0]  %s140, 128, %s2, [#allocation4]
    $region21: #{tpu_custom_call.1} parent=1 // pred_fallthru
      _
    // Predicated region
    $region22: #{tpu_custom_call.1} parent=1 // pred_check
      _
    $region23: #{tpu_custom_call.1} parent=1 // pred_check_branch
      %144 = sbr.rel (0) target = $region25
    $region24: #{tpu_custom_call.1} parent=1 // pred_region
      %s146 = ssub.s32 16, 16
      %147 = vsyncadd [#allocation9], %s146
      %s149 = sshll.u32 [#allocation8], 4
      %s150 = int_to_ptr.vmem [resolvable:$true] %s149
      %152 = dma.vmem_to_hbm [thread:$0]  %s150, 16, %s3, [#allocation9]
    $region25: #{tpu_custom_call.1} parent=1 // pred_fallthru
      _
    // Predicated region
    $region26: #{tpu_custom_call.1} parent=1 // pred_check
      _
    $region27: #{tpu_custom_call.1} parent=1 // pred_check_branch
      %154 = sbr.rel (0) target = $region29
    $region28: #{tpu_custom_call.1} parent=1 // pred_region
      %155 = dma.done [#allocation4], 128
    $region29: #{tpu_custom_call.1} parent=1 // pred_fallthru
      _
    // Predicated region
    $region30: #{tpu_custom_call.1} parent=1 // pred_check
      _
    $region31: #{tpu_custom_call.1} parent=1 // pred_check_branch
      %157 = sbr.rel (0) target = $region33
    $region32: #{tpu_custom_call.1} parent=1 // pred_region
      %158 = dma.done [#allocation9], 16
    $region33: #{tpu_custom_call.1} parent=1 // pred_fallthru
      _
    %159 = vsyncpa [#allocation3], 1
    %160 = vsyncpa [#allocation6], 1
    %161 = vsyncpa [#allocation4], 1
    %162 = vsyncpa [#allocation9], 1

</llo_original>
